<compile_context>
chip_gen: v7x
topology: tpu7x:2x2x1
jax: 0.10.0
libtpu: 0.0.40
codegen_flags: <defaults>
</compile_context>

<pallas_src>
import math

import jax
import jax.numpy as jnp
from jax.experimental import pallas as pl
from jax.experimental.pallas import tpu as pltpu


# ---------------------------------------------------------------------------
# Kernel
# ---------------------------------------------------------------------------
def polarity_kernel(x_ref, wb_ref, out_ref):
    # x_ref  : (TB, S*F)     lane-dense flattened document features
    # wb_ref : (N,  S*F + 1) row n = [ w[f, n]/S tiled over the S slots | bias_n ]
    # out_ref: (TB, N)
    #
    # out[b, n] = sum_{s,f} x[b, s*F+f] * w[f, n]/S + b_n
    #           = simple_classifier(mean_s(x))[b, n]
    x = x_ref[...].astype(jnp.float32)          # cast BEFORE the reduction (bf16-safe)
    wb = wb_ref[...].astype(jnp.float32)
    sf = x.shape[1]
    n_out = wb.shape[0]

    # VPU broadcast-multiply + XLU lane reduce per output column, stored straight
    # into its lane (no lane-axis concatenate).  Loop is unrolled at trace time (N=2).
    for n in range(n_out):
        w_n = wb[n:n + 1, 0:sf]                 # (1, SF)  static slice, same vreg tile
        b_n = wb[n:n + 1, sf:sf + 1]            # (1, 1)
        col = jnp.sum(x * w_n, axis=1, keepdims=True) + b_n      # (TB, 1)
        out_ref[:, n:n + 1] = col.astype(out_ref.dtype)


# ---------------------------------------------------------------------------
# Wrapper
# ---------------------------------------------------------------------------
def prepare_operand(params, num_sentences):
    """One-time (hoisted) weight prep: fold the 1/S mean into the classifier
    weight, tile it across the S sentence slots (lane-dense S*F contraction),
    and pack the bias as the last column -> a single weight operand."""
    w = params["w_smp"].astype(jnp.float32)                    # (F, N)
    b = params["b_smp"].astype(jnp.float32)                    # (1, N)
    s = jnp.float32(num_sentences)
    w_rep = jnp.tile(w.T / s, (1, num_sentences))              # (N, S*F)
    return jnp.concatenate([w_rep, b.T], axis=1)               # (N, S*F + 1)


@jax.jit
def polarity_forward(x, wb):
    """Effective forward of `Polarity`: simple_classifier(mean(x, dim=1))."""
    B, S, F = x.shape
    N = wb.shape[0]
    sf = S * F
    x_flat = x.reshape(B, sf).astype(jnp.float32)   # free contiguous trailing-dim merge

    cost = pl.CostEstimate(
        flops=2 * B * sf * N,
        transcendentals=0,
        bytes_accessed=4 * (B * sf + wb.size + B * N),
    )

    # Row-block grid only when B is large enough to amortize the ~0.35us per-step
    # overhead; the op is ~0.6 FLOP/byte (HBM-bandwidth bound) at scale, so big
    # row blocks are the only lever.  TB=512 (multiple of 8); blocks here are tiny
    # (<1 MiB with double-buffering) so no vmem_limit_bytes override is needed —
    # raise it (and halve TB on v7x's 64 MiB VMEM) if F grows.
    TB = 512
    if B >= 2 * TB and B % TB == 0:
        return pl.pallas_call(
            polarity_kernel,
            out_shape=jax.ShapeDtypeStruct((B, N), jnp.float32),
            grid_spec=pltpu.PrefetchScalarGridSpec(
                num_scalar_prefetch=0,
                grid=(B // TB,),
                in_specs=[
                    pl.BlockSpec((TB, sf), lambda i: (i, 0)),
                    pl.BlockSpec((N, sf + 1), lambda i: (0, 0)),
                ],
                out_specs=pl.BlockSpec((TB, N), lambda i: (i, 0)),
            ),
            compiler_params=pltpu.CompilerParams(
                # "parallel" B axis shards across v7x's 2 TensorCores; no-op on v5e/v6e.
                dimension_semantics=("parallel",),
            ),
            cost_estimate=cost,
        )(x_flat, wb)

    # Tiny-shape path: gridless, whole-array VMEM residency (live data ~1 KB).
    vmem = pl.BlockSpec(memory_space=pltpu.MemorySpace.VMEM)
    return pl.pallas_call(
        polarity_kernel,
        out_shape=jax.ShapeDtypeStruct((B, N), jnp.float32),
        in_specs=[vmem, vmem],
        out_specs=vmem,
        cost_estimate=cost,
    )(x_flat, wb)


# ---------------------------------------------------------------------------
# Params / reference
# ---------------------------------------------------------------------------
def make_params(key):
    """Deterministic init mirroring the nn.Linear shapes (stored as (in, out)).
    Only simple_classifier participates in the effective forward; the other
    three Linears feed a value PyTorch immediately overwrites."""
    def linear(key, fan_in, fan_out):
        k1, k2 = jax.random.split(key)
        bound = 1.0 / math.sqrt(fan_in)
        w = jax.random.uniform(k1, (fan_in, fan_out), jnp.float32, -bound, bound)
        b = jax.random.uniform(k2, (1, fan_out), jnp.float32, -bound, bound)
        return w, b

    k_enc, k_ffn, k_cls, k_smp = jax.random.split(key, 4)
    w_enc, b_enc = linear(k_enc, 40, 64)   # feature_encoder   (dead path)
    w_ffn, b_ffn = linear(k_ffn, 64, 5)    # feature_FFN       (dead path)
    w_cls, b_cls = linear(k_cls, 10, 2)    # classifier        (dead path)
    w_smp, b_smp = linear(k_smp, 5, 2)     # simple_classifier (live)
    return dict(w_enc=w_enc, b_enc=b_enc, w_ffn=w_ffn, b_ffn=b_ffn,
                w_cls=w_cls, b_cls=b_cls, w_smp=w_smp, b_smp=b_smp)


def polarity_reference(x, params):
    """Pure-JAX reference of the effective PyTorch forward."""
    avg_doc = jnp.mean(x.astype(jnp.float32), axis=1)
    return avg_doc @ params["w_smp"] + params["b_smp"]


if __name__ == "__main__":
    key = jax.random.PRNGKey(0)
    k_params, k_x, k_x2 = jax.random.split(key, 3)

    B, S, F = 2, 16, 5          # batch=2, 16 sentences, 5 features/sentence
    x = jax.random.normal(k_x, (B, S, F), dtype=jnp.float32)
    params = make_params(k_params)
    wb = prepare_operand(params, S)          # hoisted one-time weight/bias prep

    out = jax.block_until_ready(polarity_forward(x, wb))
    ref = polarity_reference(x, params)
    assert out.shape == (B, 2)
    assert jnp.allclose(out, ref, atol=1e-5, rtol=1e-4), (out, ref)

    # Also exercise the gridded large-B path (B-row blocks, "parallel" axis).
    B2 = 1024
    x2 = jax.random.normal(k_x2, (B2, S, F), dtype=jnp.float32)
    out2 = jax.block_until_ready(polarity_forward(x2, wb))
    ref2 = polarity_reference(x2, params)
    assert out2.shape == (B2, 2)
    assert jnp.allclose(out2, ref2, atol=1e-5, rtol=1e-4)

    print("KERNEL_OK")
</pallas_src>

<mosaic_0001>
module attributes {stable_mosaic.version = 11 : i64} {
  func.func @polarity_kernel(%arg0: memref<2x80xf32, #tpu.memory_space<vmem>>, %arg1: memref<2x81xf32, #tpu.memory_space<vmem>>, %arg2: memref<2x2xf32, #tpu.memory_space<vmem>>) attributes {dimension_semantics = [], scalar_prefetch = 0 : i64, scratch_operands = 0 : i64, tpu.core_type = #tpu.core_type<tc>} {
    %c0 = arith.constant 0 : index
    %c0_0 = arith.constant 0 : index
    %0 = vector.load %arg0[%c0, %c0_0] : memref<2x80xf32, #tpu.memory_space<vmem>>, vector<2x80xf32>
    %c0_1 = arith.constant 0 : index
    %c0_2 = arith.constant 0 : index
    %1 = vector.load %arg1[%c0_1, %c0_2] : memref<2x81xf32, #tpu.memory_space<vmem>>, vector<2x81xf32>
    %2 = vector.extract_strided_slice %1 {offsets = [0, 0], sizes = [1, 80], strides = [1, 1]} : vector<2x81xf32> to vector<1x80xf32>
    %3 = vector.extract_strided_slice %1 {offsets = [0, 80], sizes = [1, 1], strides = [1, 1]} : vector<2x81xf32> to vector<1x1xf32>
    %4 = vector.broadcast %2 : vector<1x80xf32> to vector<2x80xf32>
    %5 = arith.mulf %0, %4 : vector<2x80xf32>
    %cst = arith.constant dense<0.000000e+00> : vector<2xf32>
    %6 = vector.multi_reduction <add>, %5, %cst [1] : vector<2x80xf32> to vector<2xf32>
    %7 = vector.shape_cast %6 : vector<2xf32> to vector<2x1xf32>
    %8 = vector.broadcast %3 : vector<1x1xf32> to vector<2x1xf32>
    %9 = arith.addf %7, %8 : vector<2x1xf32>
    %c0_3 = arith.constant 0 : index
    %c0_4 = arith.constant 0 : index
    %10 = vector.load %arg2[%c0_3, %c0_4] : memref<2x2xf32, #tpu.memory_space<vmem>>, vector<2x1xf32>
    tpu.vector_store %arg2[%c0_3, %c0_4], %9 {strides = array<i32>} : memref<2x2xf32, #tpu.memory_space<vmem>>, vector<2x1xf32>,
    %11 = vector.extract_strided_slice %1 {offsets = [1, 0], sizes = [1, 80], strides = [1, 1]} : vector<2x81xf32> to vector<1x80xf32>
    %12 = vector.extract_strided_slice %1 {offsets = [1, 80], sizes = [1, 1], strides = [1, 1]} : vector<2x81xf32> to vector<1x1xf32>
    %13 = vector.broadcast %11 : vector<1x80xf32> to vector<2x80xf32>
    %14 = arith.mulf %0, %13 : vector<2x80xf32>
    %cst_5 = arith.constant dense<0.000000e+00> : vector<2xf32>
    %15 = vector.multi_reduction <add>, %14, %cst_5 [1] : vector<2x80xf32> to vector<2xf32>
    %16 = vector.shape_cast %15 : vector<2xf32> to vector<2x1xf32>
    %17 = vector.broadcast %12 : vector<1x1xf32> to vector<2x1xf32>
    %18 = arith.addf %16, %17 : vector<2x1xf32>
    %c0_6 = arith.constant 0 : index
    %c1 = arith.constant 1 : index
    %19 = vector.load %arg2[%c0_6, %c1] : memref<2x2xf32, #tpu.memory_space<vmem>>, vector<2x1xf32>
    tpu.vector_store %arg2[%c0_6, %c1], %18 {strides = array<i32>} : memref<2x2xf32, #tpu.memory_space<vmem>>, vector<2x1xf32>,
    return
  }
}

</mosaic_0001>

<llo_original>
// kernel: polarity_forward.1
$region0: #{polarity_forward.1}
  #allocation0 [shape = 'u32[]', space=smem, size = 0x4, offset = 0x4, fixed_abs, tag = 'smem constant byte address 0x4 - core index']
  #allocation1 [shape = 'u32[144,128]{1,0:T(1,128)}', space=vmem, size = 0x12000, scoped, tag = 'internal scratch']
  %s0 = inlined_call_operand.vmem [shape: f32[2,80], index: 0, kind: input, shape index: {}]
  %s1 = inlined_call_operand.vmem [shape: f32[2,81], index: 1, kind: input, shape index: {}]
  %s2 = inlined_call_operand.hbm [shape: f32[2,2], index: 2, kind: output, shape index: {}]
  %s3 = sld [smem:[#allocation0]]
  $region18: #{polarity_forward.1} parent=0
    _
  %s5 = ssub.s32 1, %s3
  %s6 = scalar_select 0, %s5, %s3
  $region1: #{polarity_forward.1} parent=0
    #allocation2 [shape = 'u8[1024]{0}', space=vmem, size = 0x400, scoped, tag = 'output window, operand 0, single buffered']
    #allocation3 [shape = 's32[1]{0}', space=sflag, size = 0x4, scoped, tag = 'scoped memory for polarity_forward.1']
    %7 = vsyncpa [#allocation3], 0
    // Predicated region
    $region2: #{polarity_forward.1} parent=1 // pred_check
      _
    $region3: #{polarity_forward.1} parent=1 // pred_check_branch
      %9 = sbr.rel (0) target = $region5
    $region4: #{polarity_forward.1} parent=1 // pred_region
      _
    $region5: #{polarity_forward.1} parent=1 // pred_fallthru
      _
    // Predicated region
    $region6: #{polarity_forward.1} parent=1 // pred_check
      _
    $region7: #{polarity_forward.1} parent=1 // pred_check_branch
      %11 = sbr.rel (0) target = $region9
    $region8: #{polarity_forward.1} parent=1 // pred_region
      _
    $region9: #{polarity_forward.1} parent=1 // pred_fallthru
      _
    %v12 = vld [vmem:[%s0] sm:$0x3]
    %v13 = vld [vmem:[%s1] sm:$0x3]
    %v14 = vlaneseq
    %v15 = vshrl.u32 %v14, 7
    %v16 = vsub.s32 0, %v15
    %v17 = vrot.slane %v13, %v16
    %v18 = vmul.f32 %v12, %v17
    %vm19 = vcmask 648192
    %v20 = vsel %vm19, %v18, 0.0
    %21 = vadd.xlane.f32.xlu0 %v20
    %v22 = vpop.xlane.xlu0 %21
    %v23 = vadd.f32 %v22, %v17
    %25 = vrot.lane.b32.xlu0 %v23, 48
    %v26 = vpop.permute.xlu0 %25
    %vm28 = vcmask 1024
    %29 = vst.msk [vmem:[#allocation2] sm:$0x3] %vm28, %v26
    %v30 = vlaneseq
    %v31 = vshrl.u32 %v30, 7
    %v32 = vsub.s32 1, %v31
    %v33 = vrot.slane %v13, %v32
    %v34 = vmul.f32 %v12, %v33
    %v35 = vsel %vm19, %v34, 0.0
    %36 = vadd.xlane.f32.xlu0 %v35
    %v37 = vpop.xlane.xlu0 %36
    %v38 = vadd.f32 %v37, %v33
    %40 = vrot.lane.b32.xlu0 %v38, 49
    %v41 = vpop.permute.xlu0 %40
    %vm43 = vcmask 9224
    %44 = vst.msk [vmem:[#allocation2] sm:$0x3] %vm43, %v41
    // Predicated region
    $region10: #{polarity_forward.1} parent=1 // pred_check
      _
    $region11: #{polarity_forward.1} parent=1 // pred_check_branch
      %46 = sbr.rel (0) target = $region13
    $region12: #{polarity_forward.1} parent=1 // pred_region
      %s48 = ssub.s32 32, 32
      %49 = vsyncadd [#allocation3], %s48
      %s51 = sshll.u32 [#allocation2], 4
      %s52 = int_to_ptr.vmem [resolvable:$true] %s51
      %54 = dma.vmem_to_hbm [thread:$0]  %s52, 32, %s2, [#allocation3]
    $region13: #{polarity_forward.1} parent=1 // pred_fallthru
      _
    // Predicated region
    $region14: #{polarity_forward.1} parent=1 // pred_check
      _
    $region15: #{polarity_forward.1} parent=1 // pred_check_branch
      %56 = sbr.rel (0) target = $region17
    $region16: #{polarity_forward.1} parent=1 // pred_region
      %57 = dma.done [#allocation3], 32
    $region17: #{polarity_forward.1} parent=1 // pred_fallthru
      _
    %58 = vsyncpa [#allocation3], 1

</llo_original>
